<compile_context>
chip_gen: v6e
topology: v6e:2x2x1
jax: 0.10.0
libtpu: 0.0.40
codegen_flags: <defaults>
</compile_context>

<pallas_src>
import jax
import jax.numpy as jnp
from jax.experimental import pallas as pl
from jax.experimental.pallas import tpu as pltpu

_SMOOTH = 1e-05
_NEG_BIG = -1e30  # sigmoid(-1e30) == 0.0 exactly in f32


def _dice_sums_kernel(pred_ref, target_ref, num_ref, den_ref):
    """Accumulate per-sample partial sums over the flattened spatial axis.

    pred_ref:   (TN, TK) float32  (padded cols hold -1e30 -> sigmoid == 0)
    target_ref: (TN, TK) bfloat16 (padded cols hold 0)
    num_ref:    (TN, 1)  float32  accumulates sum(target * sigmoid(pred))
    den_ref:    (TN, 1)  float32  accumulates sum(sigmoid(pred) + target)
    """
    k = pl.program_id(1)

    @pl.when(k == 0)
    def _():
        num_ref[...] = jnp.zeros_like(num_ref)
        den_ref[...] = jnp.zeros_like(den_ref)

    p = jax.nn.sigmoid(pred_ref[...].astype(jnp.float32))
    t = target_ref[...].astype(jnp.float32)

    # two fused per-row reductions instead of three whole-block reductions
    num_ref[...] += jnp.sum(t * p, axis=-1, keepdims=True)
    den_ref[...] += jnp.sum(p + t, axis=-1, keepdims=True)


def _round_up(x, m):
    return (x + m - 1) // m * m


def dice_loss(pred, target, *, tn_target=128, tk_target=4096):
    """Dice loss. pred, target: (N, H, W). Returns scalar float32."""
    N, H, W = pred.shape
    HW = H * W

    # lane-dense flattened layout
    pred2 = pred.astype(jnp.float32).reshape(N, HW)
    # target is a 0/1 mask -> bf16 cast is exact; halves its HBM traffic
    targ2 = target.astype(jnp.bfloat16).reshape(N, HW)

    # tile sizes: TK a large multiple of 128; TN a multiple of 16 (bf16 sublane tile)
    tk = min(tk_target, _round_up(HW, 128))
    tn = min(tn_target, _round_up(N, 16))
    hw_pad = _round_up(HW, tk)
    n_pad = _round_up(N, tn)

    # padding contributes exactly zero to all sums (sigmoid(-1e30) == 0, target pad == 0)
    pred2 = jnp.pad(pred2, ((0, n_pad - N), (0, hw_pad - HW)),
                    constant_values=_NEG_BIG)
    targ2 = jnp.pad(targ2, ((0, n_pad - N), (0, hw_pad - HW)),
                    constant_values=0)

    grid = (n_pad // tn, hw_pad // tk)

    num, den = pl.pallas_call(
        _dice_sums_kernel,
        out_shape=(
            jax.ShapeDtypeStruct((n_pad, 1), jnp.float32),
            jax.ShapeDtypeStruct((n_pad, 1), jnp.float32),
        ),
        grid_spec=pltpu.PrefetchScalarGridSpec(
            num_scalar_prefetch=0,
            grid=grid,
            in_specs=[
                pl.BlockSpec((tn, tk), lambda i, k: (i, k)),
                pl.BlockSpec((tn, tk), lambda i, k: (i, k)),
            ],
            out_specs=[
                pl.BlockSpec((tn, 1), lambda i, k: (i, 0)),
                pl.BlockSpec((tn, 1), lambda i, k: (i, 0)),
            ],
        ),
        compiler_params=pltpu.CompilerParams(
            # samples axis is parallel (2-TC sharding on v7x); spatial reduction
            # axis is last and arbitrary (output-resident accumulation).
            dimension_semantics=("parallel", "arbitrary"),
        ),
    )(pred2, targ2)

    num = num[:N, 0]
    den = den[:N, 0]
    coeff = (2.0 * num + _SMOOTH) / (den + _SMOOTH)
    return 1.0 - jnp.sum(coeff) / N


def _dice_ref(pred, target):
    """Pure-JAX reference matching the PyTorch forward exactly."""
    pred = pred.astype(jnp.float32)
    target = target.astype(jnp.float32)
    smooth = 1e-05
    p = jax.nn.sigmoid(pred)
    inter = (target * p).sum(axis=2).sum(axis=1)
    dim1 = p.sum(axis=2).sum(axis=1)
    dim2 = target.sum(axis=2).sum(axis=1)
    coeff = (2 * inter + smooth) / (dim1 + dim2 + smooth)
    return 1.0 - coeff.sum(axis=0) / coeff.shape[0]


if __name__ == "__main__":
    key = jax.random.PRNGKey(0)
    k1, k2 = jax.random.split(key)
    N, H, W = 2, 16, 16
    pred = jax.random.normal(k1, (N, H, W), dtype=jnp.float32)
    target = (jax.random.uniform(k2, (N, H, W)) > 0.5).astype(jnp.float32)

    loss = dice_loss(pred, target)
    jax.block_until_ready(loss)

    ref = _dice_ref(pred, target)
    assert jnp.allclose(loss, ref, atol=1e-5, rtol=1e-5), (loss, ref)
    print("KERNEL_OK")
</pallas_src>

<mosaic_0001>
module attributes {stable_mosaic.version = 11 : i64} {
  func.func @_dice_sums_kernel(%arg0: i32, %arg1: i32, %arg2: memref<16x256xf32, #tpu.memory_space<vmem>>, %arg3: memref<16x256xbf16, #tpu.memory_space<vmem>>, %arg4: memref<16x1xf32, #tpu.memory_space<vmem>>, %arg5: memref<16x1xf32, #tpu.memory_space<vmem>>) attributes {dimension_semantics = [#tpu.dimension_semantics<parallel>, #tpu.dimension_semantics<arbitrary>], iteration_bounds = array<i64: 1, 1>, scalar_prefetch = 0 : i64, scratch_operands = 0 : i64, tpu.core_type = #tpu.core_type<tc>, window_params = [{transform_indices = @transform_0, window_bounds = array<i64: 16, 256>}, {transform_indices = @transform_1, window_bounds = array<i64: 16, 256>}, {transform_indices = @transform_2, window_bounds = array<i64: 16, 1>}, {transform_indices = @transform_3, window_bounds = array<i64: 16, 1>}]} {
    %c0_i32 = arith.constant 0 : i32
    %0 = arith.cmpi eq, %arg1, %c0_i32 : i32
    %1 = arith.extui %0 : i1 to i32
    %c0_i32_0 = arith.constant 0 : i32
    %2 = arith.cmpi ne, %1, %c0_i32_0 : i32
    scf.if %2 {
      %cst_14 = arith.constant 0.000000e+00 : f32
      %23 = vector.broadcast %cst_14 : f32 to vector<16x1xf32>
      %c0_15 = arith.constant 0 : index
      %c0_16 = arith.constant 0 : index
      %24 = vector.load %arg4[%c0_15, %c0_16] : memref<16x1xf32, #tpu.memory_space<vmem>>, vector<16x1xf32>
      tpu.vector_store %arg4[%c0_15, %c0_16], %23 {strides = array<i32>} : memref<16x1xf32, #tpu.memory_space<vmem>>, vector<16x1xf32>,
      %cst_17 = arith.constant 0.000000e+00 : f32
      %25 = vector.broadcast %cst_17 : f32 to vector<16x1xf32>
      %c0_18 = arith.constant 0 : index
      %c0_19 = arith.constant 0 : index
      %26 = vector.load %arg5[%c0_18, %c0_19] : memref<16x1xf32, #tpu.memory_space<vmem>>, vector<16x1xf32>
      tpu.vector_store %arg5[%c0_18, %c0_19], %25 {strides = array<i32>} : memref<16x1xf32, #tpu.memory_space<vmem>>, vector<16x1xf32>,
    } else {
    }
    %c0 = arith.constant 0 : index
    %c0_1 = arith.constant 0 : index
    %3 = vector.load %arg2[%c0, %c0_1] : memref<16x256xf32, #tpu.memory_space<vmem>>, vector<16x256xf32>
    %4 = arith.negf %3 : vector<16x256xf32>
    %5 = math.exp %4 : vector<16x256xf32>
    %cst = arith.constant 1.000000e+00 : f32
    %6 = vector.broadcast %cst : f32 to vector<16x256xf32>
    %7 = arith.addf %6, %5 : vector<16x256xf32>
    %8 = arith.divf %6, %7 : vector<16x256xf32>
    %c0_2 = arith.constant 0 : index
    %c0_3 = arith.constant 0 : index
    %9 = vector.load %arg3[%c0_2, %c0_3] : memref<16x256xbf16, #tpu.memory_space<vmem>>, vector<16x256xbf16>
    %10 = arith.extf %9 : vector<16x256xbf16> to vector<16x256xf32>
    %c0_4 = arith.constant 0 : index
    %c0_5 = arith.constant 0 : index
    %11 = vector.load %arg4[%c0_4, %c0_5] : memref<16x1xf32, #tpu.memory_space<vmem>>, vector<16x1xf32>
    %12 = arith.mulf %10, %8 : vector<16x256xf32>
    %cst_6 = arith.constant dense<0.000000e+00> : vector<16xf32>
    %13 = vector.multi_reduction <add>, %12, %cst_6 [1] : vector<16x256xf32> to vector<16xf32>
    %14 = vector.shape_cast %13 : vector<16xf32> to vector<16x1xf32>
    %15 = arith.addf %11, %14 : vector<16x1xf32>
    %c0_7 = arith.constant 0 : index
    %c0_8 = arith.constant 0 : index
    %16 = vector.load %arg4[%c0_7, %c0_8] : memref<16x1xf32, #tpu.memory_space<vmem>>, vector<16x1xf32>
    tpu.vector_store %arg4[%c0_7, %c0_8], %15 {strides = array<i32>} : memref<16x1xf32, #tpu.memory_space<vmem>>, vector<16x1xf32>,
    %c0_9 = arith.constant 0 : index
    %c0_10 = arith.constant 0 : index
    %17 = vector.load %arg5[%c0_9, %c0_10] : memref<16x1xf32, #tpu.memory_space<vmem>>, vector<16x1xf32>
    %18 = arith.addf %8, %10 : vector<16x256xf32>
    %cst_11 = arith.constant dense<0.000000e+00> : vector<16xf32>
    %19 = vector.multi_reduction <add>, %18, %cst_11 [1] : vector<16x256xf32> to vector<16xf32>
    %20 = vector.shape_cast %19 : vector<16xf32> to vector<16x1xf32>
    %21 = arith.addf %17, %20 : vector<16x1xf32>
    %c0_12 = arith.constant 0 : index
    %c0_13 = arith.constant 0 : index
    %22 = vector.load %arg5[%c0_12, %c0_13] : memref<16x1xf32, #tpu.memory_space<vmem>>, vector<16x1xf32>
    tpu.vector_store %arg5[%c0_12, %c0_13], %21 {strides = array<i32>} : memref<16x1xf32, #tpu.memory_space<vmem>>, vector<16x1xf32>,
    return
  }
  func.func @transform_0(%arg0: i32, %arg1: i32) -> (i32, i32) {
    %c0_i32 = arith.constant 0 : i32
    return %arg0, %arg1 : i32, i32
  }
  func.func @transform_1(%arg0: i32, %arg1: i32) -> (i32, i32) {
    %c0_i32 = arith.constant 0 : i32
    return %arg0, %arg1 : i32, i32
  }
  func.func @transform_2(%arg0: i32, %arg1: i32) -> (i32, i32) {
    %c0_i32 = arith.constant 0 : i32
    %c0_i32_0 = arith.constant 0 : i32
    return %arg0, %c0_i32 : i32, i32
  }
  func.func @transform_3(%arg0: i32, %arg1: i32) -> (i32, i32) {
    %c0_i32 = arith.constant 0 : i32
    %c0_i32_0 = arith.constant 0 : i32
    return %arg0, %c0_i32 : i32, i32
  }
}

</mosaic_0001>

<llo_original>
// kernel: tpu_custom_call.1
$region0: #{tpu_custom_call.1}
  #allocation0 [shape = 'u32[]', space=smem, size = 0x4, offset = 0x4, fixed_abs, tag = 'smem constant byte address 0x4 - core index']
  #allocation1 [shape = 'u32[144,128]{1,0:T(1,128)}', space=vmem, size = 0x12000, scoped, tag = 'internal scratch']
  %s0 = inlined_call_operand.hbm [shape: f32[16,256], index: 0, kind: input, shape index: {}]
  %s1 = inlined_call_operand.hbm [shape: bf16[16,256], index: 1, kind: input, shape index: {}]
  %s2 = inlined_call_operand.vmem [shape: f32[16,1], index: 2, kind: output, shape index: {0}]
  %s3 = inlined_call_operand.vmem [shape: f32[16,1], index: 3, kind: output, shape index: {1}]
  %4 = xla_tuple %s2, %s3
  %s5 = sld [smem:[#allocation0]]
  $region38: #{tpu_custom_call.1} parent=0
    _
  %s7 = ssub.s32 1, %s5
  %s8 = scalar_select 0, %s7, %s5
  $region1: #{tpu_custom_call.1} parent=0
    #allocation2 [shape = 'u8[16384]{0}', space=vmem, size = 0x4000, scoped, tag = 'input window, operand 0, single buffered']
    #allocation3 [shape = 's32[1]{0}', space=sflag, size = 0x4, scoped, tag = 'scoped memory for tpu_custom_call.1']
    #allocation4 [shape = 'u8[8192]{0}', space=vmem, size = 0x2000, scoped, tag = 'input window, operand 1, single buffered']
    #allocation5 [shape = 's32[1]{0}', space=sflag, size = 0x4, scoped, tag = 'scoped memory for tpu_custom_call.1']
    %9 = vsyncpa [#allocation3], 0
    %10 = vsyncpa [#allocation5], 0
    // Predicated region
    $region2: #{tpu_custom_call.1} parent=1 // pred_check
      _
    $region3: #{tpu_custom_call.1} parent=1 // pred_check_branch
      %12 = sbr.rel (0) target = $region5
    $region4: #{tpu_custom_call.1} parent=1 // pred_region
      %s14 = ssub.s32 512, 512
      %15 = vsyncadd [#allocation3], %s14
      %s16 = sshll.u32 [#allocation2], 4
      %s17 = int_to_ptr.vmem [resolvable:$true] %s16
      %22 = dma.hbm_to_vmem [thread:$0]  %s0, 512, %s17, [#allocation3], 256, 256, 16
    $region5: #{tpu_custom_call.1} parent=1 // pred_fallthru
      _
    // Predicated region
    $region6: #{tpu_custom_call.1} parent=1 // pred_check
      _
    $region7: #{tpu_custom_call.1} parent=1 // pred_check_branch
      %24 = sbr.rel (0) target = $region9
    $region8: #{tpu_custom_call.1} parent=1 // pred_region
      %s26 = ssub.s32 256, 256
      %27 = vsyncadd [#allocation5], %s26
      %s28 = sshll.u32 [#allocation4], 4
      %s29 = int_to_ptr.vmem [resolvable:$true] %s28
      %34 = dma.hbm_to_vmem [thread:$0]  %s1, 256, %s29, [#allocation5], 128, 128, 8
    $region9: #{tpu_custom_call.1} parent=1 // pred_fallthru
      _
    // Predicated region
    $region10: #{tpu_custom_call.1} parent=1 // pred_check
      _
    $region11: #{tpu_custom_call.1} parent=1 // pred_check_branch
      %36 = sbr.rel (0) target = $region13
    $region12: #{tpu_custom_call.1} parent=1 // pred_region
      %37 = dma.done [#allocation3], 512
    $region13: #{tpu_custom_call.1} parent=1 // pred_fallthru
      _
    // Predicated region
    $region14: #{tpu_custom_call.1} parent=1 // pred_check
      _
    $region15: #{tpu_custom_call.1} parent=1 // pred_check_branch
      %39 = sbr.rel (0) target = $region17
    $region16: #{tpu_custom_call.1} parent=1 // pred_region
      %40 = dma.done [#allocation5], 256
    $region17: #{tpu_custom_call.1} parent=1 // pred_fallthru
      _
    %p41 = scmp.eq.s32.totalorder 0, 0
    // Predicated region
    $region18: #{tpu_custom_call.1} parent=1 // pred_check
      %p42 = pneg %p41
    $region19: #{tpu_custom_call.1} parent=1 // pred_check_branch
      %44 = sbr.rel (%p42) target = $region21
    $region20: #{tpu_custom_call.1} parent=1 // pred_region
      %vm45 = vcmask 7168
      %46 = vst.msk [vmem:[%s2] sm:$0xff] %vm45, 0.0
      %47 = vst.msk [vmem:[%s2 + $0x8] sm:$0xff] %vm45, 0.0
      %48 = vst.msk [vmem:[%s3] sm:$0xff] %vm45, 0.0
      %49 = vst.msk [vmem:[%s3 + $0x8] sm:$0xff] %vm45, 0.0
    $region21: #{tpu_custom_call.1} parent=1 // pred_fallthru
      _
    %v50 = vld [vmem:[#allocation2] sm:$0xff]
    %v51 = vld [vmem:[#allocation2 + $0x8] sm:$0xff]
    %v52 = vld [vmem:[#allocation2 + $0x10] sm:$0xff]
    %v53 = vld [vmem:[#allocation2 + $0x18] sm:$0xff]
    %v54 = vxor.u32 %v50, 2147483648
    %v55 = vxor.u32 %v51, 2147483648
    %v56 = vxor.u32 %v52, 2147483648
    %v57 = vxor.u32 %v53, 2147483648
    %v58 = vmul.f32 %v54, 1.442695
    %v59 = vpow.pop %v58
    %v60 = vmul.f32 %v55, 1.442695
    %v61 = vpow.pop %v60
    %v62 = vmul.f32 %v56, 1.442695
    %v63 = vpow.pop %v62
    %v64 = vmul.f32 %v57, 1.442695
    %v65 = vpow.pop %v64
    %v66 = vadd.f32 %v59, 1.0
    %v67 = vadd.f32 %v61, 1.0
    %v68 = vadd.f32 %v63, 1.0
    %v69 = vadd.f32 %v65, 1.0
    %v70 = vrcp.pop %v66
    %v71 = vmul.f32 1.0, %v70
    %v72 = vrcp.pop %v67
    %v73 = vmul.f32 1.0, %v72
    %v74 = vrcp.pop %v68
    %v75 = vmul.f32 1.0, %v74
    %v76 = vrcp.pop %v69
    %v77 = vmul.f32 1.0, %v76
    %v78 = vld [vmem:[#allocation4] sm:$0xff]
    %v79 = vld [vmem:[#allocation4 + $0x8] sm:$0xff]
    %v80 = vunpack.c.l.bf16 %v78
    %v81 = vunpack.c.h.bf16 %v78
    %v82 = vunpack.c.l.bf16 %v79
    %v83 = vunpack.c.h.bf16 %v79
    %v84 = vld [vmem:[%s2] sm:$0xff]
    %v85 = vld [vmem:[%s2 + $0x8] sm:$0xff]
    %v86 = vmul.f32 %v80, %v71
    %v87 = vmul.f32 %v81, %v73
    %v88 = vmul.f32 %v82, %v75
    %v89 = vmul.f32 %v83, %v77
    %v90 = vadd.f32 %v86, %v87
    %91 = vadd.xlane.f32.xlu0 %v90
    %v92 = vpop.xlane.xlu0 %91
    %v93 = vadd.f32 %v88, %v89
    %94 = vadd.xlane.f32.xlu0 %v93
    %v95 = vpop.xlane.xlu0 %94
    %v96 = vadd.f32 %v84, %v92
    %v97 = vadd.f32 %v85, %v95
    %vm98 = vcmask 7168
    %99 = vst.msk [vmem:[%s2] sm:$0xff] %vm98, %v96
    %100 = vst.msk [vmem:[%s2 + $0x8] sm:$0xff] %vm98, %v97
    %v101 = vld [vmem:[%s3] sm:$0xff]
    %v102 = vld [vmem:[%s3 + $0x8] sm:$0xff]
    %v103 = vadd.f32 %v71, %v80
    %v104 = vadd.f32 %v73, %v81
    %v105 = vadd.f32 %v75, %v82
    %v106 = vadd.f32 %v77, %v83
    %v107 = vadd.f32 %v103, %v104
    %108 = vadd.xlane.f32.xlu0 %v107
    %v109 = vpop.xlane.xlu0 %108
    %v110 = vadd.f32 %v105, %v106
    %111 = vadd.xlane.f32.xlu0 %v110
    %v112 = vpop.xlane.xlu0 %111
    %v113 = vadd.f32 %v101, %v109
    %v114 = vadd.f32 %v102, %v112
    %115 = vst.msk [vmem:[%s3] sm:$0xff] %vm98, %v113
    %116 = vst.msk [vmem:[%s3 + $0x8] sm:$0xff] %vm98, %v114
    // Predicated region
    $region22: #{tpu_custom_call.1} parent=1 // pred_check
      _
    $region23: #{tpu_custom_call.1} parent=1 // pred_check_branch
      %118 = sbr.rel (0) target = $region25
    $region24: #{tpu_custom_call.1} parent=1 // pred_region
      _
    $region25: #{tpu_custom_call.1} parent=1 // pred_fallthru
      _
    // Predicated region
    $region26: #{tpu_custom_call.1} parent=1 // pred_check
      _
    $region27: #{tpu_custom_call.1} parent=1 // pred_check_branch
      %120 = sbr.rel (0) target = $region29
    $region28: #{tpu_custom_call.1} parent=1 // pred_region
      _
    $region29: #{tpu_custom_call.1} parent=1 // pred_fallthru
      _
    // Predicated region
    $region30: #{tpu_custom_call.1} parent=1 // pred_check
      _
    $region31: #{tpu_custom_call.1} parent=1 // pred_check_branch
      %122 = sbr.rel (0) target = $region33
    $region32: #{tpu_custom_call.1} parent=1 // pred_region
      _
    $region33: #{tpu_custom_call.1} parent=1 // pred_fallthru
      _
    // Predicated region
    $region34: #{tpu_custom_call.1} parent=1 // pred_check
      _
    $region35: #{tpu_custom_call.1} parent=1 // pred_check_branch
      %124 = sbr.rel (0) target = $region37
    $region36: #{tpu_custom_call.1} parent=1 // pred_region
      _
    $region37: #{tpu_custom_call.1} parent=1 // pred_fallthru
      _
    %125 = vsyncpa [#allocation3], 1
    %126 = vsyncpa [#allocation5], 1

</llo_original>
